<compile_context>
chip_gen: v7x
topology: tpu7x:2x2x1
jax: 0.10.0
libtpu: 0.0.40
codegen_flags: <defaults>
</compile_context>

<pallas_src>
import jax
import jax.numpy as jnp
from jax import lax
from jax.experimental import pallas as pl
from jax.experimental.pallas import tpu as pltpu

LN_EPS = 1e-5  # PyTorch nn.LayerNorm default


def _halfslice_kernel(x_ref, w_ref, rs_ref, b_ref, o_ref):
    """One token tile, feature-major.

    x_ref:  (D, T)  D = 4C features (sublanes), T tokens (lanes, 128-multiple)
    w_ref:  (C, D)  gamma-folded Linear weight (torch layout), native dtype
    rs_ref: (C, 1)  f32 row-sums of the folded weight
    b_ref:  (C, 1)  f32 folded bias (weight @ beta + bias)
    o_ref:  (C, T)
    """
    x = x_ref[...]
    xf = x.astype(jnp.float32)

    # One-pass LayerNorm statistics over the feature (sublane) axis, in f32.
    inv_d = 1.0 / x_ref.shape[0]
    s1 = jnp.sum(xf, axis=0, keepdims=True)            # (1, T)
    s2 = jnp.sum(xf * xf, axis=0, keepdims=True)       # (1, T)
    mean = s1 * inv_d
    var = s2 * inv_d - mean * mean
    inv = lax.rsqrt(var + LN_EPS)                      # (1, T)

    # Linear on the raw (uncentered, unscaled) features: gamma is folded into
    # the weight, centering/1-sigma are applied after the matmul on the (C, T)
    # result (4x fewer elements than the (4C, T) input).  MXU operands stay in
    # the weight's native dtype, accumulation in f32.
    w = w_ref[...]
    y = jnp.dot(w, x.astype(w.dtype), preferred_element_type=jnp.float32)
    y = (y - rs_ref[...] * mean) * inv + b_ref[...]
    o_ref[...] = y.astype(o_ref.dtype)


def _vmem_capacity_bytes() -> int:
    """Per-core VMEM capacity with a per-generation fallback (review #11)."""
    try:
        info = pltpu.get_tpu_info()
        cap = int(getattr(info, "vmem_capacity_bytes", 0) or 0)
        if cap > 0:
            return cap
    except Exception:
        pass
    try:
        kind = jax.devices()[0].device_kind.lower()
        if "v7" in kind:
            return 64 << 20
        if "v4" in kind or "v5" in kind or "v6" in kind:
            return 128 << 20
    except Exception:
        pass
    return 64 << 20  # conservative default (v7x per-TensorCore VMEM)


def _pick_tile_tokens(n_tokens: int, d_in: int, c_out: int,
                      itemsize: int, batch: int) -> int:
    """Token-tile width (lane axis); a multiple of 128 or the full extent."""
    cap = _vmem_capacity_bytes()
    # VMEM bytes per token of tile width: double-buffered input + output
    # blocks, the f32 upcast used for the statistics, and ~6 (1, T) f32 stats
    # rows that pad 1 -> 8 sublanes (review #5/#10).
    per_token = 2 * (d_in + c_out) * itemsize + 2 * d_in * 4 + 6 * 8 * 4
    budget = int(cap * 0.30)            # headroom for weights + compiler scratch
    max_by_vmem = budget // max(per_token, 1)
    # ~2 MiB input blocks sit on the measured >=85% HBM-roofline plateau while
    # keeping vreg/VMEM pressure low (review #10: 4 MiB was unnecessarily big).
    target = (2 << 20) // max(d_in * itemsize, 1)
    tile = min(max_by_vmem, target, 1 << 16)
    tile = max(128, (tile // 128) * 128)
    if tile >= n_tokens:
        return n_tokens                 # single full block (full-dim rule)

    # Megacore friendliness (review #6): aim for >= 4 total grid steps
    # (>= 2 per v7x TensorCore) and an even total, never below 128 tokens.
    def steps_for(t):
        return -(-n_tokens // t)

    steps = steps_for(tile)
    while batch * steps < 4 and n_tokens // (steps + 1) >= 128:
        steps += 1
    if (batch * steps) % 2 == 1 and n_tokens // (steps + 1) >= 128:
        steps += 1
    if steps > steps_for(tile):
        tile = max(128, (n_tokens // steps) // 128 * 128)
    return tile


@jax.jit
def half_slice(x, gamma, beta, weight, bias):
    """x: (B, C, H, W); weight: (C, 4C) torch Linear layout -> (B, C, H/2, W/2)."""
    B, C, H, W = x.shape
    assert H % 2 == 0 and W % 2 == 0
    Hh, Wh = H // 2, W // 2
    D = 4 * C
    T = Hh * Wh

    # --- host-side algebraic folds (tiny, once per call; review #3/#4) ------
    #   y = Linear(LayerNorm(x))
    #     = (weight*gamma) @ ((x - mean)*inv) + (weight@beta + bias)
    #     = (W' @ x - rowsum(W')*mean) * inv + b'
    wf = weight.astype(jnp.float32)
    w_fold = wf * gamma.astype(jnp.float32)[None, :]
    b_fold = wf @ beta.astype(jnp.float32) + bias.astype(jnp.float32)
    rs = jnp.sum(w_fold, axis=1)
    w_fold = w_fold.astype(weight.dtype)

    # --- 2x2 space-to-channel gather, batch-major feature-major -------------
    # ONE fused XLA copy: (B,C,H,W) -> (B, dw, dh, C, Hh, Wh) -> (B, 4C, Hh*Wh).
    # Feature index dw*2C + dh*C + c matches torch.cat([x0, x1, x2, x3], -1).
    # TODO(synk): fuse this gather into the kernel itself to drop the extra HBM
    # round trip (~40% of total traffic, review #1).  It needs an in-kernel
    # stride-2 *lane* deinterleave (minor-axis strided load or a roll+select
    # network): BlockSpec tiles cannot express stride-2 columns, and a per-row
    # matmul decomposition makes the kernel MXU-issue-bound for realistic W.
    # Deferred until the strided-lane path is validated on all generations.
    xr = x.reshape(B, C, Hh, 2, Wh, 2)
    xt = jnp.transpose(xr, (0, 5, 3, 1, 2, 4)).reshape(B, D, T)

    tile = _pick_tile_tokens(T, D, C, x.dtype.itemsize, B)
    grid = (B, pl.cdiv(T, tile))
    cap = _vmem_capacity_bytes()
    vmem_limit = int(min(cap * 0.8, 100 * 1024 * 1024))

    out_flat = pl.pallas_call(
        _halfslice_kernel,
        out_shape=jax.ShapeDtypeStruct((B, C, T), x.dtype),
        grid_spec=pltpu.PrefetchScalarGridSpec(
            num_scalar_prefetch=0,
            grid=grid,
            in_specs=[
                pl.BlockSpec((None, D, tile), lambda b, t: (b, 0, t)),  # tokens
                pl.BlockSpec((C, D), lambda b, t: (0, 0)),              # W'
                pl.BlockSpec((C, 1), lambda b, t: (0, 0)),              # rowsum(W')
                pl.BlockSpec((C, 1), lambda b, t: (0, 0)),              # b'
            ],
            out_specs=pl.BlockSpec((None, C, tile), lambda b, t: (b, 0, t)),
        ),
        compiler_params=pltpu.CompilerParams(
            dimension_semantics=("parallel", "parallel"),
            vmem_limit_bytes=vmem_limit,
        ),
    )(xt, w_fold, rs.reshape(C, 1), b_fold.reshape(C, 1))

    # (B, C, Hh*Wh) -> (B, C, Hh, Wh): free reshape, no output transpose.
    return out_flat.reshape(B, C, Hh, Wh)


def _reference(x, gamma, beta, weight, bias):
    """Pure-JAX reference matching the PyTorch forward."""
    B, C, H, W = x.shape
    xp = jnp.transpose(x, (0, 2, 3, 1))
    x0 = xp[:, 0::2, 0::2, :]
    x1 = xp[:, 1::2, 0::2, :]
    x2 = xp[:, 0::2, 1::2, :]
    x3 = xp[:, 1::2, 1::2, :]
    xm = jnp.concatenate([x0, x1, x2, x3], -1).reshape(B, -1, 4 * C)
    mean = jnp.mean(xm, -1, keepdims=True)
    var = jnp.mean((xm - mean) ** 2, -1, keepdims=True)
    xn = (xm - mean) / jnp.sqrt(var + LN_EPS) * gamma + beta
    y = xn @ weight.T + bias
    return jnp.transpose(y.reshape(B, H // 2, W // 2, C), (0, 3, 1, 2))


if __name__ == "__main__":
    key = jax.random.PRNGKey(0)
    B, C, H, W = 2, 4, 16, 16
    D = 4 * C
    k0, k1, k2, k3, k4 = jax.random.split(key, 5)

    x = jax.random.normal(k0, (B, C, H, W), dtype=jnp.float32)

    # Deterministic params (shapes per nn.LayerNorm(4C), nn.Linear(4C, C)).
    gamma = jnp.ones((D,), jnp.float32) + 0.01 * jax.random.normal(k1, (D,), jnp.float32)
    beta = 0.01 * jax.random.normal(k2, (D,), jnp.float32)
    # torch Linear.weight layout: (out_features, in_features) = (C, 4C).
    weight = (jax.random.normal(k3, (C, D), jnp.float32) / jnp.sqrt(D)).astype(jnp.float32)
    bias = 0.01 * jax.random.normal(k4, (C,), jnp.float32)

    out = jax.block_until_ready(half_slice(x, gamma, beta, weight, bias))
    ref = _reference(x, gamma, beta, weight, bias)

    assert out.shape == (B, C, H // 2, W // 2), out.shape
    max_err = float(jnp.max(jnp.abs(out - ref)))
    assert max_err < 1e-4, max_err

    print("KERNEL_OK")
</pallas_src>

<mosaic_0001>
module attributes {stable_mosaic.version = 11 : i64} {
  func.func @_halfslice_kernel(%arg0: i32, %arg1: i32, %arg2: memref<1x16x64xf32, #tpu.memory_space<vmem>>, %arg3: memref<4x16xf32, #tpu.memory_space<vmem>>, %arg4: memref<4x1xf32, #tpu.memory_space<vmem>>, %arg5: memref<4x1xf32, #tpu.memory_space<vmem>>, %arg6: memref<1x4x64xf32, #tpu.memory_space<vmem>>) attributes {dimension_semantics = [#tpu.dimension_semantics<parallel>, #tpu.dimension_semantics<parallel>], iteration_bounds = array<i64: 2, 1>, scalar_prefetch = 0 : i64, scratch_operands = 0 : i64, tpu.core_type = #tpu.core_type<tc>, window_params = [{transform_indices = @transform_0, window_bounds = array<i64: 1, 16, 64>}, {pipeline_mode = #tpu.pipeline_mode<synchronous>, transform_indices = @transform_1, window_bounds = array<i64: 4, 16>}, {pipeline_mode = #tpu.pipeline_mode<synchronous>, transform_indices = @transform_2, window_bounds = array<i64: 4, 1>}, {pipeline_mode = #tpu.pipeline_mode<synchronous>, transform_indices = @transform_3, window_bounds = array<i64: 4, 1>}, {transform_indices = @transform_4, window_bounds = array<i64: 1, 4, 64>}]} {
    %c0 = arith.constant 0 : index
    %c0_0 = arith.constant 0 : index
    %c0_1 = arith.constant 0 : index
    %0 = vector.load %arg2[%c0, %c0_0, %c0_1] : memref<1x16x64xf32, #tpu.memory_space<vmem>>, vector<1x16x64xf32>
    %1 = vector.shape_cast %0 : vector<1x16x64xf32> to vector<16x64xf32>
    %cst = arith.constant dense<0.000000e+00> : vector<64xf32>
    %2 = vector.multi_reduction <add>, %1, %cst [0] : vector<16x64xf32> to vector<64xf32>
    %3 = vector.shape_cast %2 : vector<64xf32> to vector<1x64xf32>
    %4 = arith.mulf %1, %1 : vector<16x64xf32>
    %cst_2 = arith.constant dense<0.000000e+00> : vector<64xf32>
    %5 = vector.multi_reduction <add>, %4, %cst_2 [0] : vector<16x64xf32> to vector<64xf32>
    %6 = vector.shape_cast %5 : vector<64xf32> to vector<1x64xf32>
    %cst_3 = arith.constant 6.250000e-02 : f32
    %7 = vector.broadcast %cst_3 : f32 to vector<1x64xf32>
    %8 = arith.mulf %3, %7 : vector<1x64xf32>
    %cst_4 = arith.constant 6.250000e-02 : f32
    %9 = vector.broadcast %cst_4 : f32 to vector<1x64xf32>
    %10 = arith.mulf %6, %9 : vector<1x64xf32>
    %11 = arith.mulf %8, %8 : vector<1x64xf32>
    %12 = arith.subf %10, %11 : vector<1x64xf32>
    %cst_5 = arith.constant 9.99999974E-6 : f32
    %13 = vector.broadcast %cst_5 : f32 to vector<1x64xf32>
    %14 = arith.addf %12, %13 : vector<1x64xf32>
    %15 = math.rsqrt %14 : vector<1x64xf32>
    %c0_6 = arith.constant 0 : index
    %c0_7 = arith.constant 0 : index
    %16 = vector.load %arg3[%c0_6, %c0_7] : memref<4x16xf32, #tpu.memory_space<vmem>>, vector<4x16xf32>
    %cst_8 = arith.constant dense<0.000000e+00> : vector<4x64xf32>
    %17 = tpu.matmul %16, %1, %cst_8 {dimension_numbers = #tpu.dot_dimension_numbers<[1], [0], [0], [1], [0, 0, 1, 1], [], []>} : vector<4x16xf32>, vector<16x64xf32>, vector<4x64xf32> -> vector<4x64xf32>
    %c0_9 = arith.constant 0 : index
    %c0_10 = arith.constant 0 : index
    %18 = vector.load %arg4[%c0_9, %c0_10] : memref<4x1xf32, #tpu.memory_space<vmem>>, vector<4x1xf32>
    %19 = vector.broadcast %18 : vector<4x1xf32> to vector<4x64xf32>
    %20 = vector.broadcast %8 : vector<1x64xf32> to vector<4x64xf32>
    %21 = arith.mulf %19, %20 : vector<4x64xf32>
    %22 = arith.subf %17, %21 : vector<4x64xf32>
    %23 = vector.broadcast %15 : vector<1x64xf32> to vector<4x64xf32>
    %24 = arith.mulf %22, %23 : vector<4x64xf32>
    %c0_11 = arith.constant 0 : index
    %c0_12 = arith.constant 0 : index
    %25 = vector.load %arg5[%c0_11, %c0_12] : memref<4x1xf32, #tpu.memory_space<vmem>>, vector<4x1xf32>
    %26 = vector.broadcast %25 : vector<4x1xf32> to vector<4x64xf32>
    %27 = arith.addf %24, %26 : vector<4x64xf32>
    %c0_13 = arith.constant 0 : index
    %c0_14 = arith.constant 0 : index
    %c0_15 = arith.constant 0 : index
    %28 = vector.load %arg6[%c0_13, %c0_14, %c0_15] : memref<1x4x64xf32, #tpu.memory_space<vmem>>, vector<1x4x64xf32>
    %29 = vector.shape_cast %28 : vector<1x4x64xf32> to vector<4x64xf32>
    %30 = vector.shape_cast %27 : vector<4x64xf32> to vector<1x4x64xf32>
    tpu.vector_store %arg6[%c0_13, %c0_14, %c0_15], %30 {strides = array<i32>} : memref<1x4x64xf32, #tpu.memory_space<vmem>>, vector<1x4x64xf32>,
    return
  }
  func.func @transform_0(%arg0: i32, %arg1: i32) -> (i32, i32, i32) {
    %c0_i32 = arith.constant 0 : i32
    %c0_i32_0 = arith.constant 0 : i32
    return %arg0, %c0_i32, %arg1 : i32, i32, i32
  }
  func.func @transform_1(%arg0: i32, %arg1: i32) -> (i32, i32) {
    %c0_i32 = arith.constant 0 : i32
    %c0_i32_0 = arith.constant 0 : i32
    %c0_i32_1 = arith.constant 0 : i32
    return %c0_i32, %c0_i32_0 : i32, i32
  }
  func.func @transform_2(%arg0: i32, %arg1: i32) -> (i32, i32) {
    %c0_i32 = arith.constant 0 : i32
    %c0_i32_0 = arith.constant 0 : i32
    %c0_i32_1 = arith.constant 0 : i32
    return %c0_i32, %c0_i32_0 : i32, i32
  }
  func.func @transform_3(%arg0: i32, %arg1: i32) -> (i32, i32) {
    %c0_i32 = arith.constant 0 : i32
    %c0_i32_0 = arith.constant 0 : i32
    %c0_i32_1 = arith.constant 0 : i32
    return %c0_i32, %c0_i32_0 : i32, i32
  }
  func.func @transform_4(%arg0: i32, %arg1: i32) -> (i32, i32, i32) {
    %c0_i32 = arith.constant 0 : i32
    %c0_i32_0 = arith.constant 0 : i32
    return %arg0, %c0_i32, %arg1 : i32, i32, i32
  }
}

</mosaic_0001>

<llo_original>
// kernel: half_slice.1
$region0: #{half_slice.1}
  #allocation0 [shape = 'u32[]', space=smem, size = 0x4, offset = 0x4, fixed_abs, tag = 'smem constant byte address 0x4 - core index']
  #allocation1 [shape = 'u32[144,128]{1,0:T(1,128)}', space=vmem, size = 0x12000, scoped, tag = 'internal scratch']
  %s0 = inlined_call_operand.vmem [shape: f32[2,16,64], index: 0, kind: input, shape index: {}]
  %s1 = inlined_call_operand.vmem [shape: f32[4,16], index: 1, kind: input, shape index: {}]
  %s2 = inlined_call_operand.vmem [shape: f32[4,1], index: 2, kind: input, shape index: {}]
  %s3 = inlined_call_operand.vmem [shape: f32[4,1], index: 3, kind: input, shape index: {}]
  %s4 = inlined_call_operand.vmem [shape: f32[2,4,64], index: 4, kind: output, shape index: {}]
  %s5 = sld [smem:[#allocation0]]
  $region49: #{half_slice.1} parent=0
    _
  %s7 = ssub.s32 1, %s5
  %s8 = scalar_select 0, %s7, %s5
  loop: start=0, step=1, limit=4
  $region2: #{half_slice.1} parent=0 // loop_pre_header
    _
  $region3: #{half_slice.1} parent=0 // loop_header
    %s10 = sphi 0, %s14
    %p11 = scmp.ge.s32.totalorder %s10, 4
    %s17 = sphi 0, %s29
    %s18 = sphi 0, %s25
    %s19 = sphi 0, %s17
    %s20 = sphi 0, %s18
    %s21 = sphi 0, %s19
    %s22 = sphi 0, %s20
    %s34 = sphi 0, %s36
    %s37 = sphi 0, %s34
    %s38 = sphi 0, %s37
    %s54 = sphi 0, %s38
    %s58 = sphi 0, %s58
    %s60 = sphi 0, %s58
    %s61 = sphi 0, %s60
    %s75 = sphi 0, %s61
    %s79 = sphi 0, %s79
    %s81 = sphi 0, %s79
    %s82 = sphi 0, %s81
    %s96 = sphi 0, %s82
    %s100 = sphi 0, %s100
    %s102 = sphi 0, %s100
    %s103 = sphi 0, %s102
    %s117 = sphi 0, %s103
    %s125 = sphi 0, %s127
    %s128 = sphi 0, %s125
    %s129 = sphi 0, %s128
    %s145 = sphi 0, %s129
  $region4: #{half_slice.1} parent=0 // loop_header_branch
    %13 = sbr.rel (%p11) target = $region8
  $region5: #{half_slice.1} parent=0 // loop_body
    %s15 = ssub.s32 %s10, 1
    %s16 = ssub.s32 %s10, 2
    %s23 = sadd.s32 1, %s18
    %p24 = scmp.ge.s32.totalorder %s23, 1
    %s25 = scalar_select %p24, 0, %s23
    %s26 = sadd.s32 1, %s17
    %s27 = scalar_select %p24, %s26, %s17
    %p28 = scmp.ge.s32.totalorder %s27, 2
    %s29 = scalar_select %p28, 0, %s27
    %s30 = ssub.s32 %s17, %s29
    %s31 = ssub.s32 %s18, %s25
    %s32 = sor.u32 %s30, %s31
    %p33 = scmp.eq.s32.totalorder %s32, 0
    %s35 = sadd.s32 %s34, 1
    %s36 = scalar_select %p33, %s34, %s35
    %p39 = pneg %p33
    %p40 = scmp.eq.s32.totalorder %s10, 1
    %p41 = por %p39, %p40
    %p42 = scmp.ne.s32.totalorder %s34, %s37
    %p43 = scmp.eq.s32.totalorder %s10, 0
    %p44 = por %p42, %p43
    %p45 = scmp.ne.s32.totalorder %s34, %s37
    %p46 = scmp.eq.s32.totalorder %s15, 1
    %p47 = por %p45, %p46
    %p48 = scmp.ne.s32.totalorder %s37, %s38
    %p49 = scmp.eq.s32.totalorder %s15, 0
    %p50 = por %p48, %p49
    %p51 = scmp.ne.s32.totalorder %s37, %s38
    %p52 = scmp.eq.s32.totalorder %s16, 1
    %p53 = por %p51, %p52
    %p55 = scmp.ne.s32.totalorder %s38, %s54
    %p56 = scmp.eq.s32.totalorder %s16, 0
    %p57 = por %p55, %p56
    %s59 = sadd.s32 %s58, 1
    %p62 = scmp.eq.s32.totalorder %s10, 1
    %p63 = scmp.ne.s32.totalorder %s58, %s60
    %p64 = scmp.eq.s32.totalorder %s10, 0
    %p65 = por %p63, %p64
    %p66 = scmp.ne.s32.totalorder %s58, %s60
    %p67 = scmp.eq.s32.totalorder %s15, 1
    %p68 = por %p66, %p67
    %p69 = scmp.ne.s32.totalorder %s60, %s61
    %p70 = scmp.eq.s32.totalorder %s15, 0
    %p71 = por %p69, %p70
    %p72 = scmp.ne.s32.totalorder %s60, %s61
    %p73 = scmp.eq.s32.totalorder %s16, 1
    %p74 = por %p72, %p73
    %p76 = scmp.ne.s32.totalorder %s61, %s75
    %p77 = scmp.eq.s32.totalorder %s16, 0
    %p78 = por %p76, %p77
    %s80 = sadd.s32 %s79, 1
    %p83 = scmp.eq.s32.totalorder %s10, 1
    %p84 = scmp.ne.s32.totalorder %s79, %s81
    %p85 = scmp.eq.s32.totalorder %s10, 0
    %p86 = por %p84, %p85
    %p87 = scmp.ne.s32.totalorder %s79, %s81
    %p88 = scmp.eq.s32.totalorder %s15, 1
    %p89 = por %p87, %p88
    %p90 = scmp.ne.s32.totalorder %s81, %s82
    %p91 = scmp.eq.s32.totalorder %s15, 0
    %p92 = por %p90, %p91
    %p93 = scmp.ne.s32.totalorder %s81, %s82
    %p94 = scmp.eq.s32.totalorder %s16, 1
    %p95 = por %p93, %p94
    %p97 = scmp.ne.s32.totalorder %s82, %s96
    %p98 = scmp.eq.s32.totalorder %s16, 0
    %p99 = por %p97, %p98
    %s101 = sadd.s32 %s100, 1
    %p104 = scmp.eq.s32.totalorder %s10, 1
    %p105 = scmp.ne.s32.totalorder %s100, %s102
    %p106 = scmp.eq.s32.totalorder %s10, 0
    %p107 = por %p105, %p106
    %p108 = scmp.ne.s32.totalorder %s100, %s102
    %p109 = scmp.eq.s32.totalorder %s15, 1
    %p110 = por %p108, %p109
    %p111 = scmp.ne.s32.totalorder %s102, %s103
    %p112 = scmp.eq.s32.totalorder %s15, 0
    %p113 = por %p111, %p112
    %p114 = scmp.ne.s32.totalorder %s102, %s103
    %p115 = scmp.eq.s32.totalorder %s16, 1
    %p116 = por %p114, %p115
    %p118 = scmp.ne.s32.totalorder %s103, %s117
    %p119 = scmp.eq.s32.totalorder %s16, 0
    %p120 = por %p118, %p119
    %s121 = ssub.s32 %s17, %s29
    %s122 = ssub.s32 %s18, %s25
    %s123 = sor.u32 %s121, %s122
    %p124 = scmp.eq.s32.totalorder %s123, 0
    %s126 = sadd.s32 %s125, 1
    %s127 = scalar_select %p124, %s125, %s126
    %p130 = pneg %p124
    %p131 = scmp.eq.s32.totalorder %s10, 1
    %p132 = por %p130, %p131
    %p133 = scmp.ne.s32.totalorder %s125, %s128
    %p134 = scmp.eq.s32.totalorder %s10, 0
    %p135 = por %p133, %p134
    %p136 = scmp.ne.s32.totalorder %s125, %s128
    %p137 = scmp.eq.s32.totalorder %s15, 1
    %p138 = por %p136, %p137
    %p139 = scmp.ne.s32.totalorder %s128, %s129
    %p140 = scmp.eq.s32.totalorder %s15, 0
    %p141 = por %p139, %p140
    %p142 = scmp.ne.s32.totalorder %s128, %s129
    %p143 = scmp.eq.s32.totalorder %s16, 1
    %p144 = por %p142, %p143
    %p146 = scmp.ne.s32.totalorder %s129, %s145
    %p147 = scmp.eq.s32.totalorder %s16, 0
    %p148 = por %p146, %p147
    %p149 = scmp.le.s32.totalorder 1, %s10
    %p150 = scmp.lt.s32.totalorder %s10, 3
    %p151 = pnand %p149, %p150
    %p152 = pneg %p151
    // Predicated region
    $region9: #{half_slice.1} parent=5 // pred_check
      _
    $region10: #{half_slice.1} parent=5 // pred_check_branch
      %154 = sbr.rel (%p151) target = $region12
    $region11: #{half_slice.1} parent=5 // pred_region
      %s155 = ssub.s32 %s10, 1
      // Predicated region
      $region13: #{half_slice.1} parent=11 // pred_check
        %p156 = pneg %p71
      $region14: #{half_slice.1} parent=11 // pred_check_branch
        %158 = sbr.rel (%p156) target = $region16
      $region15: #{half_slice.1} parent=11 // pred_region
        _
      $region16: #{half_slice.1} parent=11 // pred_fallthru
        _
      // Predicated region
      $region17: #{half_slice.1} parent=11 // pred_check
        %p159 = pneg %p92
      $region18: #{half_slice.1} parent=11 // pred_check_branch
        %161 = sbr.rel (%p159) target = $region20
      $region19: #{half_slice.1} parent=11 // pred_region
        _
      $region20: #{half_slice.1} parent=11 // pred_fallthru
        _
      // Predicated region
      $region21: #{half_slice.1} parent=11 // pred_check
        %p162 = pneg %p113
      $region22: #{half_slice.1} parent=11 // pred_check_branch
        %164 = sbr.rel (%p162) target = $region24
      $region23: #{half_slice.1} parent=11 // pred_region
        _
      $region24: #{half_slice.1} parent=11 // pred_fallthru
        _
    $region12: #{half_slice.1} parent=5 // pred_fallthru
      _
    %p165 = scmp.lt.s32.totalorder %s10, 2
    // Predicated region
    $region25: #{half_slice.1} parent=5 // pred_check
      %p166 = pneg %p165
    $region26: #{half_slice.1} parent=5 // pred_check_branch
      %168 = sbr.rel (%p166) target = $region28
    $region27: #{half_slice.1} parent=5 // pred_region
      // Predicated region
      $region29: #{half_slice.1} parent=27 // pred_check
        %p169 = pneg %p44
      $region30: #{half_slice.1} parent=27 // pred_check_branch
        %171 = sbr.rel (%p169) target = $region32
      $region31: #{half_slice.1} parent=27 // pred_region
        %p172 = scmp.lt.s32.totalorder %s17, 1
        %s173 = scalar_select %p172, %s17, 1
        %p174 = scmp.lt.s32.totalorder %s18, 0
        %s175 = scalar_select %p174, %s18, 0
        %s176 = smul.addr %s173, 2
        %s177 = sadd.s32 %s175, %s176
        %s178 = smul.addr %s177, 8
        %s179 = scalar_lea.vmem %s0, %s178
      $region32: #{half_slice.1} parent=27 // pred_fallthru
        _
    $region28: #{half_slice.1} parent=5 // pred_fallthru
      _
    %p180 = scmp.le.s32.totalorder 1, %s10
    %p181 = scmp.lt.s32.totalorder %s10, 3
    %p182 = pnand %p180, %p181
    %p183 = pneg %p182
    // Predicated region
    $region33: #{half_slice.1} parent=5 // pred_check
      _
    $region34: #{half_slice.1} parent=5 // pred_check_branch
      %185 = sbr.rel (%p182) target = $region36
    $region35: #{half_slice.1} parent=5 // pred_region
      %s186 = ssub.s32 %s10, 1
      %p187 = scmp.lt.s32.totalorder %s19, 1
      %s188 = scalar_select %p187, %s19, 1
      %p189 = scmp.lt.s32.totalorder %s20, 0
      %s190 = scalar_select %p189, %s20, 0
      %s191 = smul.addr %s188, 2
      %s192 = sadd.s32 %s190, %s191
      %s193 = smul.addr %s192, 8
      %s194 = scalar_lea.vmem %s0, %s193
      %p195 = pneg %p50
      %p196 = pneg %p47
      %p197 = pneg %p71
      %p198 = pneg %p68
      %p199 = pneg %p92
      %p200 = pneg %p89
      %p201 = pneg %p113
      %p202 = pneg %p110
      %p203 = pneg %p141
      %p204 = pneg %p138
      %p205 = scmp.lt.s32.totalorder %s19, 1
      %s206 = scalar_select %p205, %s19, 1
      %p207 = scmp.lt.s32.totalorder %s20, 0
      %s208 = scalar_select %p207, %s20, 0
      %s209 = sadd.s32 %s208, %s206
      %s210 = smul.addr %s209, 4
      %s211 = scalar_lea.vmem %s4, %s210
      %p212 = scmp.lt.s32.totalorder %s19, 1
      %s213 = scalar_select %p212, %s19, 1
      %p214 = scmp.lt.s32.totalorder %s20, 0
      %s215 = scalar_select %p214, %s20, 0
      %s216 = smul.addr %s213, 2
      %s217 = sadd.s32 %s215, %s216
      %s218 = smul.addr %s217, 8
      %s219 = scalar_lea.vmem %s0, %s218
      %p220 = scmp.lt.s32.totalorder %s19, 1
      %s221 = scalar_select %p220, %s19, 1
      %p222 = scmp.lt.s32.totalorder %s20, 0
      %s223 = scalar_select %p222, %s20, 0
      %s224 = sadd.s32 %s223, %s221
      %s225 = smul.addr %s224, 4
      %s226 = scalar_lea.vmem %s4, %s225
      %v227 = vld [vmem:[%s219] sm:$0xff]
      %v228 = vld [vmem:[%s219 + $0x8] sm:$0xff]
      %vm229 = vcmask 523264
      %v230 = vsel %vm229, %v227, 0.0
      %v231 = vsel %vm229, %v228, 0.0
      %v232 = vadd.f32 %v230, %v231
      %v233 = vrot.slane %v232, 4
      %v234 = vadd.f32 %v232, %v233
      %v235 = vrot.slane %v234, 2
      %v236 = vadd.f32 %v234, %v235
      %v237 = vrot.slane %v236, 1
      %v238 = vadd.f32 %v236, %v237
      %v239 = vmul.f32 %v227, %v227
      %v240 = vmul.f32 %v228, %v228
      %v241 = vsel %vm229, %v239, 0.0
      %v242 = vsel %vm229, %v240, 0.0
      %v243 = vadd.f32 %v241, %v242
      %v244 = vrot.slane %v243, 4
      %v245 = vadd.f32 %v243, %v244
      %v246 = vrot.slane %v245, 2
      %v247 = vadd.f32 %v245, %v246
      %v248 = vrot.slane %v247, 1
      %v249 = vadd.f32 %v247, %v248
      %v250 = vmul.f32 %v238, 0.0625
      %v251 = vmul.f32 %v249, 0.0625
      %v252 = vmul.f32 %v250, %v250
      %v253 = vsub.f32 %v251, %v252
      %v254 = vadd.f32 %v253, 1e-05
      %v255 = vrsqrt.pop %v254
      %v256 = vld [vmem:[%s1] sm:$0xf]
      %vm257 = vcmask 130048
      %v259 = vsel %vm257, %v256, 0
      %261 = vmatprep.subr.mxu0 0.0
      %262 = vmatpush1.msra.mxu0 %v227
      %263 = vmatprep.subr.mxu0 0.0
      %264 = vmatpush1.msra.mxu0 %v228
      %265 = vmatprep.subr.mxu0 0.0
      %266 = vmatpush1.msra.mxu0 0.0
      %267 = vmatprep.subr.mxu0 0.0
      %268 = vmatpush1.msra.mxu0 0.0
      %269 = vmatprep.subr.mxu0 0.0
      %270 = vmatpush1.msra.mxu0 0.0
      %271 = vmatprep.subr.mxu0 0.0
      %272 = vmatpush1.msra.mxu0 0.0
      %273 = vmatprep.subr.mxu0 0.0
      %274 = vmatpush1.msra.mxu0 0.0
      %275 = vmatprep.subr.mxu0 0.0
      %276 = vmatpush1.msra.mxu0 0.0
      %277 = vmatprep.subr.mxu0 0.0
      %278 = vmatpush1.msra.mxu0 0.0
      %279 = vmatprep.subr.mxu0 0.0
      %280 = vmatpush1.msra.mxu0 0.0
      %281 = vmatprep.subr.mxu0 0.0
      %282 = vmatpush1.msra.mxu0 0.0
      %283 = vmatprep.subr.mxu0 0.0
      %284 = vmatpush1.msra.mxu0 0.0
      %285 = vmatprep.subr.mxu0 0.0
      %286 = vmatpush1.msra.mxu0 0.0
      %287 = vmatprep.subr.mxu0 0.0
      %288 = vmatpush1.msra.mxu0 0.0
      %289 = vmatprep.subr.mxu0 0.0
      %290 = vmatpush1.msra.mxu0 0.0
      %291 = vmatprep.subr.mxu0 0.0
      %292 = vmatpush1.msra.mxu0 0.0
      %293 = vmatprep.subr.mxu0 0.0
      %294 = vmatpush1.msra.mxu0 0.0
      %295 = vmatprep.subr.mxu0 0.0
      %296 = vmatpush1.msra.mxu0 0.0
      %297 = vmatprep.subr.mxu0 0.0
      %298 = vmatpush1.msra.mxu0 0.0
      %299 = vmatprep.subr.mxu0 0.0
      %300 = vmatpush1.msra.mxu0 0.0
      %301 = vmatprep.subr.mxu0 0.0
      %302 = vmatpush1.msra.mxu0 0.0
      %303 = vmatprep.subr.mxu0 0.0
      %304 = vmatpush1.msra.mxu0 0.0
      %305 = vmatprep.subr.mxu0 0.0
      %306 = vmatpush1.msra.mxu0 0.0
      %307 = vmatprep.subr.mxu0 0.0
      %308 = vmatpush1.msra.mxu0 0.0
      %309 = vmatprep.subr.mxu0 0.0
      %310 = vmatpush1.msra.mxu0 0.0
      %311 = vmatprep.subr.mxu0 0.0
      %312 = vmatpush1.msra.mxu0 0.0
      %313 = vmatprep.subr.mxu0 0.0
      %314 = vmatpush1.msra.mxu0 0.0
      %315 = vmatprep.subr.mxu0 0.0
      %316 = vmatpush1.msra.mxu0 0.0
      %317 = vmatprep.subr.mxu0 0.0
      %318 = vmatpush1.msra.mxu0 0.0
      %319 = vmatprep.subr.mxu0 0.0
      %320 = vmatpush1.msra.mxu0 0.0
      %321 = vmatprep.subr.mxu0 0.0
      %322 = vmatpush1.msra.mxu0 0.0
      %323 = vmatprep.subr.mxu0 0.0
      %324 = vmatpush1.msra.mxu0 0.0
      %325 = vmatprep.mubr.f32.mxu0 0.0
      %326 = vmatmul.mubr.f32.gmra.mrb[0].mxu0 %v259
      %v327 = vpop.f32.mrb[0].mxu0
      %v328 = vadd.f32 0.0, %v327
      %v329 = vpop.f32.mrb[0].mxu0
      %330 = vdwg.mxu0
      %v331 = vld [vmem:[%s2] sm:$0xf]
      %333 = vset.pattern.permute.xlu0 0
      %334 = vperm.xlu0 %333, %v331
      %v335 = vpop.permute.xlu0 %334
      %v337 = vmul.f32 %v335, %v250
      %v338 = vsub.f32 %v328, %v337
      %v339 = vmul.f32 %v338, %v255
      %v340 = vld [vmem:[%s3] sm:$0xf]
      %342 = vset.pattern.permute.xlu0 0
      %343 = vperm.xlu0 %342, %v340
      %v344 = vpop.permute.xlu0 %343
      %v346 = vadd.f32 %v339, %v344
      %vm347 = vcmask 519168
      %348 = vst.msk [vmem:[%s226] sm:$0xf] %vm347, %v346
      %p349 = scmp.lt.s32.totalorder %s19, 1
      %s350 = scalar_select %p349, %s19, 1
      %p351 = scmp.lt.s32.totalorder %s20, 0
      %s352 = scalar_select %p351, %s20, 0
      %s353 = sadd.s32 %s352, %s350
      %s354 = smul.addr %s353, 4
      %s355 = scalar_lea.vmem %s4, %s354
      // Predicated region
      $region37: #{half_slice.1} parent=35 // pred_check
        %p356 = pneg %p138
      $region38: #{half_slice.1} parent=35 // pred_check_branch
        %358 = sbr.rel (%p356) target = $region40
      $region39: #{half_slice.1} parent=35 // pred_region
        _
      $region40: #{half_slice.1} parent=35 // pred_fallthru
        _
    $region36: #{half_slice.1} parent=5 // pred_fallthru
      _
    %p359 = scmp.le.s32.totalorder 2, %s10
    // Predicated region
    $region41: #{half_slice.1} parent=5 // pred_check
      %p360 = pneg %p359
    $region42: #{half_slice.1} parent=5 // pred_check_branch
      %362 = sbr.rel (%p360) target = $region44
    $region43: #{half_slice.1} parent=5 // pred_region
      %s363 = ssub.s32 %s10, 2
      // Predicated region
      $region45: #{half_slice.1} parent=43 // pred_check
        %p364 = pneg %p144
      $region46: #{half_slice.1} parent=43 // pred_check_branch
        %366 = sbr.rel (%p364) target = $region48
      $region47: #{half_slice.1} parent=43 // pred_region
        %p367 = scmp.lt.s32.totalorder %s21, 1
        %s368 = scalar_select %p367, %s21, 1
        %p369 = scmp.lt.s32.totalorder %s22, 0
        %s370 = scalar_select %p369, %s22, 0
        %s371 = sadd.s32 %s370, %s368
        %s372 = smul.addr %s371, 4
        %s373 = scalar_lea.vmem %s4, %s372
      $region48: #{half_slice.1} parent=43 // pred_fallthru
        _
    $region44: #{half_slice.1} parent=5 // pred_fallthru
      _
  $region6: #{half_slice.1} parent=0 // loop_footer
    %s14 = sadd.s32 1, %s10
  $region7: #{half_slice.1} parent=0 // loop_footer_branch
    %9 = sbr.rel target = $region3
  $region8: #{half_slice.1} parent=0 // loop_exit
    _

</llo_original>
